<compile_context>
chip_gen: v5e
topology: v5e:2x2
jax: 0.10.0
libtpu: 0.0.40
codegen_flags: <defaults>
</compile_context>

<pallas_src>
import jax
import jax.numpy as jnp
from jax import lax
from jax.experimental import pallas as pl
from jax.experimental.pallas import tpu as pltpu

LANES = 128


def _dirac_schedule_kernel(shift_ref, ev_ref, out_ref):
    """Delay E_TILE event rows by shift_ref[e] 128-sample blocks, zero-filling the head.

    shift_ref : (n_events,) int32 scalar-prefetch (SMEM) -- delay in 128-sample blocks.
    ev_ref / out_ref : (E_TILE, rows, 128) lane-dense view of E_TILE events.
    """
    t = pl.program_id(0)
    e_tile, rows, _ = ev_ref.shape
    # Shift-independent row index mask, hoisted out of the per-event loop.
    row_ids = lax.broadcasted_iota(jnp.int32, (rows, 1), 0)

    def body(i, carry):
        s = shift_ref[t * e_tile + i]                    # delay in rows (128-sample blocks)
        ev = ev_ref[i]                                   # (rows, 128)
        shifted = pltpu.roll(ev, shift=s, axis=0)        # out[j] = ev[(j - s) % rows]
        # Rows j < s are the linear-convolution zero head (kill the wrap-around).
        out_ref[i] = jnp.where(row_ids >= s, shifted, jnp.zeros_like(shifted))
        return carry

    lax.fori_loop(0, e_tile, body, 0, unroll=True)


def _pick_event_tile(n_events, rows, itemsize):
    """Largest E_TILE in {8,4,2} dividing n_events, leaving >=2 grid steps, fitting VMEM."""
    e_tile = 1
    for cand in (8, 4, 2):
        if n_events % cand == 0 and n_events // cand >= 2:
            e_tile = cand
            break
    # in + out, double-buffered, must stay well under v5e's 16 MiB default scoped VMEM.
    while e_tile > 1 and 4 * e_tile * rows * LANES * itemsize > 12 * 1024 * 1024:
        e_tile //= 2
    return e_tile


def dirac_scheduler_forward(pos, events):
    """final = fft_convolve(events, upsample_with_holes(sparse_softmax(pos), n_samples))."""
    b, n_events, start_size = pos.shape
    n_samples = events.shape[-1]
    assert b == 1 and events.shape[:2] == (1, n_events)
    assert n_samples % start_size == 0
    factor = n_samples // start_size                     # upsample_with_holes hop
    assert n_samples % LANES == 0
    assert factor % LANES == 0, (
        "TODO(synk): non-128-aligned hop sizes need a lane-granular shift")
    rows = n_samples // LANES
    assert rows % 8 == 0, "n_samples must be a multiple of 1024"

    # sparse_softmax(pos, normalize=True): one-hot at argmax with amplitude exactly 1.
    # argmax(softmax(x)) == argmax(x) -> skip the softmax entirely.
    # (jnp.argmax takes the first index on ties, matching torch.max.)
    idx = jnp.argmax(pos.reshape(n_events, start_size), axis=-1).astype(jnp.int32)
    row_shift = idx * (factor // LANES)                  # delay measured in 128-sample blocks

    # Keep the source dtype end-to-end (a delay is exact in any dtype).
    ev_blocks = events.reshape(n_events, rows, LANES)
    itemsize = ev_blocks.dtype.itemsize
    e_tile = _pick_event_tile(n_events, rows, itemsize)
    grid = (n_events // e_tile,)

    out = pl.pallas_call(
        _dirac_schedule_kernel,
        out_shape=jax.ShapeDtypeStruct((n_events, rows, LANES), ev_blocks.dtype),
        grid_spec=pltpu.PrefetchScalarGridSpec(
            num_scalar_prefetch=1,
            grid=grid,
            in_specs=[pl.BlockSpec((e_tile, rows, LANES), lambda t, shifts: (t, 0, 0))],
            out_specs=pl.BlockSpec((e_tile, rows, LANES), lambda t, shifts: (t, 0, 0)),
        ),
        compiler_params=pltpu.CompilerParams(
            dimension_semantics=("parallel",)),          # megacore: split events across TCs
        cost_estimate=pl.CostEstimate(
            flops=0, transcendentals=0,
            bytes_accessed=2 * n_events * n_samples * itemsize),
    )(row_shift, ev_blocks)

    return out.reshape(1, n_events, n_samples)


def reference_forward(pos, events):
    """Pure-JAX transcription of the PyTorch module (FFT path), used only for verification."""
    b, n_events, start_size = pos.shape
    n_samples = events.shape[-1]
    factor = n_samples // start_size
    # sparse_softmax(pos, normalize=True, dim=-1)
    idx = jnp.argmax(pos, axis=-1)
    hard = jax.nn.one_hot(idx, start_size, dtype=jnp.float32)
    # upsample_with_holes(pos, desired_size=n_samples)
    dirac = jnp.zeros((b, n_events, n_samples), jnp.float32)
    dirac = dirac.at[..., ::factor].set(hard)
    # fft_convolve(events, dirac): zero-pad to 2N, multiply spectra, truncate to N
    n_fft = 2 * n_samples
    spec = (jnp.fft.rfft(events.astype(jnp.float32), n=n_fft, axis=-1)
            * jnp.fft.rfft(dirac, n=n_fft, axis=-1))
    return jnp.fft.irfft(spec, n=n_fft, axis=-1)[..., :n_samples]


if __name__ == "__main__":
    # Small shapes consistent with the module (original: n_events=32, n_samples=2**16).
    N_EVENTS = 8
    N_SAMPLES = 2 ** 13      # 8192 samples per event
    START_SIZE = 64          # scheduler start_size -> hop of 128 samples

    key = jax.random.PRNGKey(0)
    k_pos, k_ev = jax.random.split(key)
    pos = jax.random.uniform(k_pos, (1, N_EVENTS, START_SIZE), jnp.float32, -0.02, 0.02)
    events = jax.random.uniform(k_ev, (1, N_EVENTS, N_SAMPLES), jnp.float32, -1.0, 1.0)

    fwd = jax.jit(dirac_scheduler_forward)
    out = jax.block_until_ready(fwd(pos, events))
    assert out.shape == (1, N_EVENTS, N_SAMPLES), out.shape
    assert bool(jnp.all(jnp.isfinite(out)))

    # The kernel path is a bit-exact delayed copy; the residual error below is the FFT
    # reference's own f32 roundoff.
    ref = jax.block_until_ready(reference_forward(pos, events))
    max_err = float(jnp.max(jnp.abs(out - ref)))
    assert max_err < 2e-2, f"mismatch vs FFT reference: max abs err = {max_err}"
    print("KERNEL_OK")
</pallas_src>

<mosaic_0001>
module attributes {stable_mosaic.version = 11 : i64} {
  func.func @_dirac_schedule_kernel(%arg0: i32, %arg1: memref<8xi32, #tpu.memory_space<smem>>, %arg2: memref<4x64x128xf32, #tpu.memory_space<vmem>>, %arg3: memref<4x64x128xf32, #tpu.memory_space<vmem>>) attributes {dimension_semantics = [#tpu.dimension_semantics<parallel>], iteration_bounds = array<i64: 2>, scalar_prefetch = 1 : i64, scratch_operands = 0 : i64, tpu.core_type = #tpu.core_type<tc>, window_params = [{transform_indices = @transform_0, window_bounds = array<i64: 4, 64, 128>}, {transform_indices = @transform_1, window_bounds = array<i64: 4, 64, 128>}]} {
    %0 = tpu.iota {dimensions = array<i32: 0>} : vector<64x1xi32>
    %c0_i32 = arith.constant 0 : i32
    %c4_i32 = arith.constant 4 : i32
    %1 = arith.muli %arg0, %c4_i32 : i32
    %2 = arith.addi %1, %c0_i32 : i32
    %3 = arith.index_cast %2 : i32 to index
    %4 = memref.load %arg1[%3] : memref<8xi32, #tpu.memory_space<smem>>
    %5 = arith.index_cast %c0_i32 : i32 to index
    %c0 = arith.constant 0 : index
    %c0_0 = arith.constant 0 : index
    %6 = vector.load %arg2[%5, %c0, %c0_0] : memref<4x64x128xf32, #tpu.memory_space<vmem>>, vector<1x64x128xf32>
    %7 = vector.shape_cast %6 : vector<1x64x128xf32> to vector<64x128xf32>
    %8 = tpu.dynamic_rotate %7 by %4 dim 0 : vector<64x128xf32>, i32 -> vector<64x128xf32>
    %9 = vector.broadcast %4 : i32 to vector<64x1xi32>
    %10 = arith.cmpi sge, %0, %9 : vector<64x1xi32>
    %cst = arith.constant 0.000000e+00 : f32
    %11 = vector.broadcast %cst : f32 to vector<64x128xf32>
    %12 = vector.shape_cast %10 : vector<64x1xi1> to vector<64x1xi1>
    %13 = vector.broadcast %12 : vector<64x1xi1> to vector<64x128xi1>
    %14 = arith.select %13, %8, %11 : vector<64x128xi1>, vector<64x128xf32>
    %15 = arith.index_cast %c0_i32 : i32 to index
    %c0_1 = arith.constant 0 : index
    %c0_2 = arith.constant 0 : index
    %16 = vector.load %arg3[%15, %c0_1, %c0_2] : memref<4x64x128xf32, #tpu.memory_space<vmem>>, vector<1x64x128xf32>
    %17 = vector.shape_cast %16 : vector<1x64x128xf32> to vector<64x128xf32>
    %18 = vector.shape_cast %14 : vector<64x128xf32> to vector<1x64x128xf32>
    tpu.vector_store %arg3[%15, %c0_1, %c0_2], %18 {strides = array<i32>} : memref<4x64x128xf32, #tpu.memory_space<vmem>>, vector<1x64x128xf32>,
    %c1_i32 = arith.constant 1 : i32
    %c4_i32_3 = arith.constant 4 : i32
    %19 = arith.muli %arg0, %c4_i32_3 : i32
    %20 = arith.addi %19, %c1_i32 : i32
    %21 = arith.index_cast %20 : i32 to index
    %22 = memref.load %arg1[%21] : memref<8xi32, #tpu.memory_space<smem>>
    %23 = arith.index_cast %c1_i32 : i32 to index
    %c0_4 = arith.constant 0 : index
    %c0_5 = arith.constant 0 : index
    %24 = vector.load %arg2[%23, %c0_4, %c0_5] : memref<4x64x128xf32, #tpu.memory_space<vmem>>, vector<1x64x128xf32>
    %25 = vector.shape_cast %24 : vector<1x64x128xf32> to vector<64x128xf32>
    %26 = tpu.dynamic_rotate %25 by %22 dim 0 : vector<64x128xf32>, i32 -> vector<64x128xf32>
    %27 = vector.broadcast %22 : i32 to vector<64x1xi32>
    %28 = arith.cmpi sge, %0, %27 : vector<64x1xi32>
    %cst_6 = arith.constant 0.000000e+00 : f32
    %29 = vector.broadcast %cst_6 : f32 to vector<64x128xf32>
    %30 = vector.shape_cast %28 : vector<64x1xi1> to vector<64x1xi1>
    %31 = vector.broadcast %30 : vector<64x1xi1> to vector<64x128xi1>
    %32 = arith.select %31, %26, %29 : vector<64x128xi1>, vector<64x128xf32>
    %33 = arith.index_cast %c1_i32 : i32 to index
    %c0_7 = arith.constant 0 : index
    %c0_8 = arith.constant 0 : index
    %34 = vector.load %arg3[%33, %c0_7, %c0_8] : memref<4x64x128xf32, #tpu.memory_space<vmem>>, vector<1x64x128xf32>
    %35 = vector.shape_cast %34 : vector<1x64x128xf32> to vector<64x128xf32>
    %36 = vector.shape_cast %32 : vector<64x128xf32> to vector<1x64x128xf32>
    tpu.vector_store %arg3[%33, %c0_7, %c0_8], %36 {strides = array<i32>} : memref<4x64x128xf32, #tpu.memory_space<vmem>>, vector<1x64x128xf32>,
    %c2_i32 = arith.constant 2 : i32
    %c4_i32_9 = arith.constant 4 : i32
    %37 = arith.muli %arg0, %c4_i32_9 : i32
    %38 = arith.addi %37, %c2_i32 : i32
    %39 = arith.index_cast %38 : i32 to index
    %40 = memref.load %arg1[%39] : memref<8xi32, #tpu.memory_space<smem>>
    %41 = arith.index_cast %c2_i32 : i32 to index
    %c0_10 = arith.constant 0 : index
    %c0_11 = arith.constant 0 : index
    %42 = vector.load %arg2[%41, %c0_10, %c0_11] : memref<4x64x128xf32, #tpu.memory_space<vmem>>, vector<1x64x128xf32>
    %43 = vector.shape_cast %42 : vector<1x64x128xf32> to vector<64x128xf32>
    %44 = tpu.dynamic_rotate %43 by %40 dim 0 : vector<64x128xf32>, i32 -> vector<64x128xf32>
    %45 = vector.broadcast %40 : i32 to vector<64x1xi32>
    %46 = arith.cmpi sge, %0, %45 : vector<64x1xi32>
    %cst_12 = arith.constant 0.000000e+00 : f32
    %47 = vector.broadcast %cst_12 : f32 to vector<64x128xf32>
    %48 = vector.shape_cast %46 : vector<64x1xi1> to vector<64x1xi1>
    %49 = vector.broadcast %48 : vector<64x1xi1> to vector<64x128xi1>
    %50 = arith.select %49, %44, %47 : vector<64x128xi1>, vector<64x128xf32>
    %51 = arith.index_cast %c2_i32 : i32 to index
    %c0_13 = arith.constant 0 : index
    %c0_14 = arith.constant 0 : index
    %52 = vector.load %arg3[%51, %c0_13, %c0_14] : memref<4x64x128xf32, #tpu.memory_space<vmem>>, vector<1x64x128xf32>
    %53 = vector.shape_cast %52 : vector<1x64x128xf32> to vector<64x128xf32>
    %54 = vector.shape_cast %50 : vector<64x128xf32> to vector<1x64x128xf32>
    tpu.vector_store %arg3[%51, %c0_13, %c0_14], %54 {strides = array<i32>} : memref<4x64x128xf32, #tpu.memory_space<vmem>>, vector<1x64x128xf32>,
    %c3_i32 = arith.constant 3 : i32
    %c4_i32_15 = arith.constant 4 : i32
    %55 = arith.muli %arg0, %c4_i32_15 : i32
    %56 = arith.addi %55, %c3_i32 : i32
    %57 = arith.index_cast %56 : i32 to index
    %58 = memref.load %arg1[%57] : memref<8xi32, #tpu.memory_space<smem>>
    %59 = arith.index_cast %c3_i32 : i32 to index
    %c0_16 = arith.constant 0 : index
    %c0_17 = arith.constant 0 : index
    %60 = vector.load %arg2[%59, %c0_16, %c0_17] : memref<4x64x128xf32, #tpu.memory_space<vmem>>, vector<1x64x128xf32>
    %61 = vector.shape_cast %60 : vector<1x64x128xf32> to vector<64x128xf32>
    %62 = tpu.dynamic_rotate %61 by %58 dim 0 : vector<64x128xf32>, i32 -> vector<64x128xf32>
    %63 = vector.broadcast %58 : i32 to vector<64x1xi32>
    %64 = arith.cmpi sge, %0, %63 : vector<64x1xi32>
    %cst_18 = arith.constant 0.000000e+00 : f32
    %65 = vector.broadcast %cst_18 : f32 to vector<64x128xf32>
    %66 = vector.shape_cast %64 : vector<64x1xi1> to vector<64x1xi1>
    %67 = vector.broadcast %66 : vector<64x1xi1> to vector<64x128xi1>
    %68 = arith.select %67, %62, %65 : vector<64x128xi1>, vector<64x128xf32>
    %69 = arith.index_cast %c3_i32 : i32 to index
    %c0_19 = arith.constant 0 : index
    %c0_20 = arith.constant 0 : index
    %70 = vector.load %arg3[%69, %c0_19, %c0_20] : memref<4x64x128xf32, #tpu.memory_space<vmem>>, vector<1x64x128xf32>
    %71 = vector.shape_cast %70 : vector<1x64x128xf32> to vector<64x128xf32>
    %72 = vector.shape_cast %68 : vector<64x128xf32> to vector<1x64x128xf32>
    tpu.vector_store %arg3[%69, %c0_19, %c0_20], %72 {strides = array<i32>} : memref<4x64x128xf32, #tpu.memory_space<vmem>>, vector<1x64x128xf32>,
    %c4_i32_21 = arith.constant 4 : i32
    return
  }
  func.func @transform_0(%arg0: i32, %arg1: memref<8xi32, #tpu.memory_space<smem>>) -> (i32, i32, i32) {
    %c0_i32 = arith.constant 0 : i32
    %c0_i32_0 = arith.constant 0 : i32
    %c0_i32_1 = arith.constant 0 : i32
    return %arg0, %c0_i32, %c0_i32_0 : i32, i32, i32
  }
  func.func @transform_1(%arg0: i32, %arg1: memref<8xi32, #tpu.memory_space<smem>>) -> (i32, i32, i32) {
    %c0_i32 = arith.constant 0 : i32
    %c0_i32_0 = arith.constant 0 : i32
    %c0_i32_1 = arith.constant 0 : i32
    return %arg0, %c0_i32, %c0_i32_0 : i32, i32, i32
  }
}

</mosaic_0001>

<llo_original>
// kernel: dirac_scheduler_forward.1
$region0: #{dirac_scheduler_forward.1}
  #allocation0 [shape = 'u32[]', space=smem, size = 0x4, offset = 0x4, fixed_abs, tag = 'smem constant byte address 0x4 - core index']
  #allocation1 [shape = 'u32[72,128]{1,0:T(1,128)}', space=vmem, size = 0x9000, scoped, tag = 'internal scratch']
  #allocation2 [shape = 's32[1]{0}', space=sflag, size = 0x4, scoped, tag = 'scoped memory for dirac_scheduler_forward.1']
  #allocation3 [shape = 'u8[512]{0}', space=smem, size = 0x200, scoped, tag = 'prefetched SMEM operand 0']
  %s0 = inlined_call_operand.vmem [shape: s32[8], index: 0, kind: input, shape index: {}]
  %s1 = inlined_call_operand.vmem [shape: f32[8,64,128], index: 1, kind: input, shape index: {}]
  %s2 = inlined_call_operand.vmem [shape: f32[8,64,128], index: 2, kind: output, shape index: {}]
  %s3 = sld [smem:[#allocation0]]
  $region37: #{dirac_scheduler_forward.1} parent=0
    _
  %s5 = ssub.s32 1, %s3
  %s6 = scalar_select 0, %s5, %s3
  %s8 = sshll.u32 %s0, 4
  %s9 = int_to_ptr.vmem [resolvable:$true] %s8
  %11 = dma.vmem_to_smem %s9, 16, [#allocation3], [#allocation2]
  %13 = dma.done [#allocation2], 16
  %14 = sfence
  loop: start=0, step=1, limit=4
  $region2: #{dirac_scheduler_forward.1} parent=0 // loop_pre_header
    _
  $region3: #{dirac_scheduler_forward.1} parent=0 // loop_header
    %s16 = sphi 0, %s20
    %p17 = scmp.ge.s32.totalorder %s16, 4
    %s26 = sphi 0, %s28
    %s29 = sphi 0, %s26
    %s30 = sphi 0, %s29
    %s46 = sphi 0, %s30
    %s52 = sphi 0, %s54
    %s55 = sphi 0, %s52
    %s56 = sphi 0, %s55
    %s72 = sphi 0, %s56
  $region4: #{dirac_scheduler_forward.1} parent=0 // loop_header_branch
    %19 = sbr.rel (%p17) target = $region8
  $region5: #{dirac_scheduler_forward.1} parent=0 // loop_body
    %s21 = ssub.s32 %s16, 1
    %s22 = ssub.s32 %s16, 2
    %s23 = sadd.s32 %s16, 1
    %s24 = ssub.s32 %s16, %s23
    %p25 = scmp.eq.s32.totalorder %s24, 0
    %s27 = sadd.s32 %s26, 1
    %s28 = scalar_select %p25, %s26, %s27
    %p31 = pneg %p25
    %p32 = scmp.eq.s32.totalorder %s16, 1
    %p33 = por %p31, %p32
    %p34 = scmp.ne.s32.totalorder %s26, %s29
    %p35 = scmp.eq.s32.totalorder %s16, 0
    %p36 = por %p34, %p35
    %p37 = scmp.ne.s32.totalorder %s26, %s29
    %p38 = scmp.eq.s32.totalorder %s21, 1
    %p39 = por %p37, %p38
    %p40 = scmp.ne.s32.totalorder %s29, %s30
    %p41 = scmp.eq.s32.totalorder %s21, 0
    %p42 = por %p40, %p41
    %p43 = scmp.ne.s32.totalorder %s29, %s30
    %p44 = scmp.eq.s32.totalorder %s22, 1
    %p45 = por %p43, %p44
    %p47 = scmp.ne.s32.totalorder %s30, %s46
    %p48 = scmp.eq.s32.totalorder %s22, 0
    %p49 = por %p47, %p48
    %s50 = ssub.s32 %s16, %s23
    %p51 = scmp.eq.s32.totalorder %s50, 0
    %s53 = sadd.s32 %s52, 1
    %s54 = scalar_select %p51, %s52, %s53
    %p57 = pneg %p51
    %p58 = scmp.eq.s32.totalorder %s16, 1
    %p59 = por %p57, %p58
    %p60 = scmp.ne.s32.totalorder %s52, %s55
    %p61 = scmp.eq.s32.totalorder %s16, 0
    %p62 = por %p60, %p61
    %p63 = scmp.ne.s32.totalorder %s52, %s55
    %p64 = scmp.eq.s32.totalorder %s21, 1
    %p65 = por %p63, %p64
    %p66 = scmp.ne.s32.totalorder %s55, %s56
    %p67 = scmp.eq.s32.totalorder %s21, 0
    %p68 = por %p66, %p67
    %p69 = scmp.ne.s32.totalorder %s55, %s56
    %p70 = scmp.eq.s32.totalorder %s22, 1
    %p71 = por %p69, %p70
    %p73 = scmp.ne.s32.totalorder %s56, %s72
    %p74 = scmp.eq.s32.totalorder %s22, 0
    %p75 = por %p73, %p74
    %p76 = scmp.le.s32.totalorder 1, %s16
    %p77 = scmp.lt.s32.totalorder %s16, 3
    %p78 = pnand %p76, %p77
    %p79 = pneg %p78
    // Predicated region
    $region9: #{dirac_scheduler_forward.1} parent=5 // pred_check
      _
    $region10: #{dirac_scheduler_forward.1} parent=5 // pred_check_branch
      %81 = sbr.rel (%p78) target = $region12
    $region11: #{dirac_scheduler_forward.1} parent=5 // pred_region
      %s82 = ssub.s32 %s16, 1
    $region12: #{dirac_scheduler_forward.1} parent=5 // pred_fallthru
      _
    %p83 = scmp.lt.s32.totalorder %s16, 2
    // Predicated region
    $region13: #{dirac_scheduler_forward.1} parent=5 // pred_check
      %p84 = pneg %p83
    $region14: #{dirac_scheduler_forward.1} parent=5 // pred_check_branch
      %86 = sbr.rel (%p84) target = $region16
    $region15: #{dirac_scheduler_forward.1} parent=5 // pred_region
      // Predicated region
      $region17: #{dirac_scheduler_forward.1} parent=15 // pred_check
        %p87 = pneg %p36
      $region18: #{dirac_scheduler_forward.1} parent=15 // pred_check_branch
        %89 = sbr.rel (%p87) target = $region20
      $region19: #{dirac_scheduler_forward.1} parent=15 // pred_region
        %s90 = smul.u32 4, %s16
        %p91 = scmp.lt.s32.totalorder %s90, 7
        %s92 = scalar_select %p91, %s90, 7
        %s93 = smul.addr %s92, 8
        %s94 = smul.addr %s93, 8
        %s95 = scalar_lea.vmem %s1, %s94
        %s96 = smul.u32 4, %s16
      $region20: #{dirac_scheduler_forward.1} parent=15 // pred_fallthru
        _
    $region16: #{dirac_scheduler_forward.1} parent=5 // pred_fallthru
      _
    %p97 = scmp.le.s32.totalorder 1, %s16
    %p98 = scmp.lt.s32.totalorder %s16, 3
    %p99 = pnand %p97, %p98
    %p100 = pneg %p99
    // Predicated region
    $region21: #{dirac_scheduler_forward.1} parent=5 // pred_check
      _
    $region22: #{dirac_scheduler_forward.1} parent=5 // pred_check_branch
      %102 = sbr.rel (%p99) target = $region24
    $region23: #{dirac_scheduler_forward.1} parent=5 // pred_region
      %s103 = ssub.s32 %s16, 1
      %s104 = smul.u32 4, %s21
      %p105 = scmp.lt.s32.totalorder %s104, 7
      %s106 = scalar_select %p105, %s104, 7
      %s107 = smul.addr %s106, 8
      %s108 = smul.addr %s107, 8
      %s109 = scalar_lea.vmem %s1, %s108
      %p110 = pneg %p42
      %p111 = pneg %p39
      %p112 = pneg %p68
      %p113 = pneg %p65
      %s114 = smul.u32 4, %s21
      %p115 = scmp.lt.s32.totalorder %s114, 7
      %s116 = scalar_select %p115, %s114, 7
      %s117 = smul.addr %s116, 8
      %s118 = smul.addr %s117, 8
      %s119 = scalar_lea.vmem %s2, %s118
      %s120 = smul.u32 4, %s21
      %p121 = scmp.lt.s32.totalorder %s120, 7
      %s122 = scalar_select %p121, %s120, 7
      %s123 = smul.addr %s122, 8
      %s124 = smul.addr %s123, 8
      %s125 = scalar_lea.vmem %s1, %s124
      %s126 = smul.u32 4, %s21
      %s127 = smul.u32 4, %s21
      %p128 = scmp.lt.s32.totalorder %s127, 7
      %s129 = scalar_select %p128, %s127, 7
      %s130 = smul.addr %s129, 8
      %s131 = smul.addr %s130, 8
      %s132 = scalar_lea.vmem %s2, %s131
      %s133 = smul.u32 4, %s21
      %v134 = vlaneseq
      %v135 = vshrl.u32 %v134, 7
      %v136 = vadd.s32 %v135, 8
      %v137 = vadd.s32 %v135, 16
      %v138 = vadd.s32 %v135, 24
      %v139 = vadd.s32 %v135, 32
      %v140 = vadd.s32 %v135, 40
      %v141 = vadd.s32 %v135, 48
      %v142 = vadd.s32 %v135, 56
      %s143 = smul.u32 %s21, 4
      %s144 = sld [smem:[#allocation3 + %s143]]
      %v145 = vld [vmem:[%s125] sm:$0xff]
      %v146 = vld [vmem:[%s125 + $0x8] sm:$0xff]
      %v147 = vld [vmem:[%s125 + $0x10] sm:$0xff]
      %v148 = vld [vmem:[%s125 + $0x18] sm:$0xff]
      %v149 = vld [vmem:[%s125 + $0x20] sm:$0xff]
      %v150 = vld [vmem:[%s125 + $0x28] sm:$0xff]
      %v151 = vld [vmem:[%s125 + $0x30] sm:$0xff]
      %v152 = vld [vmem:[%s125 + $0x38] sm:$0xff]
      %s153 = sand.u32 %s144, 63
      %s154 = sand.u32 %s153, 7
      %s155 = sshrl.u32 %s153, 3
      %s156 = ssub.s32 8, %s154
      %v157 = vstv %s156
      %v158 = vrot.slane %v145, %v157
      %v159 = vstv %s156
      %v160 = vrot.slane %v146, %v159
      %v161 = vstv %s156
      %v162 = vrot.slane %v147, %v161
      %v163 = vstv %s156
      %v164 = vrot.slane %v148, %v163
      %v165 = vstv %s156
      %v166 = vrot.slane %v149, %v165
      %v167 = vstv %s156
      %v168 = vrot.slane %v150, %v167
      %v169 = vstv %s156
      %v170 = vrot.slane %v151, %v169
      %v171 = vstv %s156
      %v172 = vrot.slane %v152, %v171
      %v173 = vstv %s154
      %vm174 = vcmp.lt.s32.totalorder %v135, %v173
      %v175 = vsel %vm174, %v170, %v172
      %v176 = vsel %vm174, %v168, %v170
      %v177 = vsel %vm174, %v166, %v168
      %v178 = vsel %vm174, %v164, %v166
      %v179 = vsel %vm174, %v162, %v164
      %v180 = vsel %vm174, %v160, %v162
      %v181 = vsel %vm174, %v158, %v160
      %v182 = vsel %vm174, %v172, %v158
      %s183 = sand.u32 %s155, 1
      %v184 = vstv %s183
      %vm185 = vcmp.ne.s32.totalorder %v184, 0
      %v186 = vsel %vm185, %v175, %v182
      %v187 = vsel %vm185, %v182, %v181
      %v188 = vsel %vm185, %v181, %v180
      %v189 = vsel %vm185, %v180, %v179
      %v190 = vsel %vm185, %v179, %v178
      %v191 = vsel %vm185, %v178, %v177
      %v192 = vsel %vm185, %v177, %v176
      %v193 = vsel %vm185, %v176, %v175
      %s194 = sand.u32 %s155, 2
      %v195 = vstv %s194
      %vm196 = vcmp.ne.s32.totalorder %v195, 0
      %v197 = vsel %vm196, %v192, %v186
      %v198 = vsel %vm196, %v193, %v187
      %v199 = vsel %vm196, %v186, %v188
      %v200 = vsel %vm196, %v187, %v189
      %v201 = vsel %vm196, %v188, %v190
      %v202 = vsel %vm196, %v189, %v191
      %v203 = vsel %vm196, %v190, %v192
      %v204 = vsel %vm196, %v191, %v193
      %s205 = sand.u32 %s155, 4
      %v206 = vstv %s205
      %vm207 = vcmp.ne.s32.totalorder %v206, 0
      %v208 = vsel %vm207, %v201, %v197
      %v209 = vsel %vm207, %v202, %v198
      %v210 = vsel %vm207, %v203, %v199
      %v211 = vsel %vm207, %v204, %v200
      %v212 = vsel %vm207, %v197, %v201
      %v213 = vsel %vm207, %v198, %v202
      %v214 = vsel %vm207, %v199, %v203
      %v215 = vsel %vm207, %v200, %v204
      %v216 = vstv %s144
      %vm217 = vcmp.ge.s32.totalorder %v135, %v216
      %vm218 = vcmp.ge.s32.totalorder %v136, %v216
      %vm219 = vcmp.ge.s32.totalorder %v137, %v216
      %vm220 = vcmp.ge.s32.totalorder %v138, %v216
      %vm221 = vcmp.ge.s32.totalorder %v139, %v216
      %vm222 = vcmp.ge.s32.totalorder %v140, %v216
      %vm223 = vcmp.ge.s32.totalorder %v141, %v216
      %vm224 = vcmp.ge.s32.totalorder %v142, %v216
      %v225 = vsel %vm217, 1, 0
      %v226 = vsel %vm218, 1, 0
      %v227 = vsel %vm219, 1, 0
      %v228 = vsel %vm220, 1, 0
      %v229 = vsel %vm221, 1, 0
      %v230 = vsel %vm222, 1, 0
      %v231 = vsel %vm223, 1, 0
      %v232 = vsel %vm224, 1, 0
      %vm233 = vcmp.eq.s32.totalorder %v225, 1
      %vm234 = vcmp.eq.s32.totalorder %v226, 1
      %vm235 = vcmp.eq.s32.totalorder %v227, 1
      %vm236 = vcmp.eq.s32.totalorder %v228, 1
      %vm237 = vcmp.eq.s32.totalorder %v229, 1
      %vm238 = vcmp.eq.s32.totalorder %v230, 1
      %vm239 = vcmp.eq.s32.totalorder %v231, 1
      %vm240 = vcmp.eq.s32.totalorder %v232, 1
      %v241 = vsel %vm233, %v208, 0.0
      %v242 = vsel %vm234, %v209, 0.0
      %v243 = vsel %vm235, %v210, 0.0
      %v244 = vsel %vm236, %v211, 0.0
      %v245 = vsel %vm237, %v212, 0.0
      %v246 = vsel %vm238, %v213, 0.0
      %v247 = vsel %vm239, %v214, 0.0
      %v248 = vsel %vm240, %v215, 0.0
      %249 = vst [vmem:[%s132] sm:$0xff] %v241
      %250 = vst [vmem:[%s132 + $0x8] sm:$0xff] %v242
      %251 = vst [vmem:[%s132 + $0x10] sm:$0xff] %v243
      %252 = vst [vmem:[%s132 + $0x18] sm:$0xff] %v244
      %253 = vst [vmem:[%s132 + $0x20] sm:$0xff] %v245
      %254 = vst [vmem:[%s132 + $0x28] sm:$0xff] %v246
      %255 = vst [vmem:[%s132 + $0x30] sm:$0xff] %v247
      %256 = vst [vmem:[%s132 + $0x38] sm:$0xff] %v248
      %s257 = sadd.s32 %s143, 1
      %s258 = sld [smem:[#allocation3 + %s257]]
      %s259 = scalar_lea.vmem %s125, 64
      %v260 = vld [vmem:[%s259] sm:$0xff]
      %v261 = vld [vmem:[%s259 + $0x8] sm:$0xff]
      %v262 = vld [vmem:[%s259 + $0x10] sm:$0xff]
      %v263 = vld [vmem:[%s259 + $0x18] sm:$0xff]
      %v264 = vld [vmem:[%s259 + $0x20] sm:$0xff]
      %v265 = vld [vmem:[%s259 + $0x28] sm:$0xff]
      %v266 = vld [vmem:[%s259 + $0x30] sm:$0xff]
      %v267 = vld [vmem:[%s259 + $0x38] sm:$0xff]
      %s268 = sand.u32 %s258, 63
      %s269 = sand.u32 %s268, 7
      %s270 = sshrl.u32 %s268, 3
      %s271 = ssub.s32 8, %s269
      %v272 = vstv %s271
      %v273 = vrot.slane %v260, %v272
      %v274 = vstv %s271
      %v275 = vrot.slane %v261, %v274
      %v276 = vstv %s271
      %v277 = vrot.slane %v262, %v276
      %v278 = vstv %s271
      %v279 = vrot.slane %v263, %v278
      %v280 = vstv %s271
      %v281 = vrot.slane %v264, %v280
      %v282 = vstv %s271
      %v283 = vrot.slane %v265, %v282
      %v284 = vstv %s271
      %v285 = vrot.slane %v266, %v284
      %v286 = vstv %s271
      %v287 = vrot.slane %v267, %v286
      %v288 = vstv %s269
      %vm289 = vcmp.lt.s32.totalorder %v135, %v288
      %v290 = vsel %vm289, %v285, %v287
      %v291 = vsel %vm289, %v283, %v285
      %v292 = vsel %vm289, %v281, %v283
      %v293 = vsel %vm289, %v279, %v281
      %v294 = vsel %vm289, %v277, %v279
      %v295 = vsel %vm289, %v275, %v277
      %v296 = vsel %vm289, %v273, %v275
      %v297 = vsel %vm289, %v287, %v273
      %s298 = sand.u32 %s270, 1
      %v299 = vstv %s298
      %vm300 = vcmp.ne.s32.totalorder %v299, 0
      %v301 = vsel %vm300, %v290, %v297
      %v302 = vsel %vm300, %v297, %v296
      %v303 = vsel %vm300, %v296, %v295
      %v304 = vsel %vm300, %v295, %v294
      %v305 = vsel %vm300, %v294, %v293
      %v306 = vsel %vm300, %v293, %v292
      %v307 = vsel %vm300, %v292, %v291
      %v308 = vsel %vm300, %v291, %v290
      %s309 = sand.u32 %s270, 2
      %v310 = vstv %s309
      %vm311 = vcmp.ne.s32.totalorder %v310, 0
      %v312 = vsel %vm311, %v307, %v301
      %v313 = vsel %vm311, %v308, %v302
      %v314 = vsel %vm311, %v301, %v303
      %v315 = vsel %vm311, %v302, %v304
      %v316 = vsel %vm311, %v303, %v305
      %v317 = vsel %vm311, %v304, %v306
      %v318 = vsel %vm311, %v305, %v307
      %v319 = vsel %vm311, %v306, %v308
      %s320 = sand.u32 %s270, 4
      %v321 = vstv %s320
      %vm322 = vcmp.ne.s32.totalorder %v321, 0
      %v323 = vsel %vm322, %v316, %v312
      %v324 = vsel %vm322, %v317, %v313
      %v325 = vsel %vm322, %v318, %v314
      %v326 = vsel %vm322, %v319, %v315
      %v327 = vsel %vm322, %v312, %v316
      %v328 = vsel %vm322, %v313, %v317
      %v329 = vsel %vm322, %v314, %v318
      %v330 = vsel %vm322, %v315, %v319
      %v331 = vstv %s258
      %vm332 = vcmp.ge.s32.totalorder %v135, %v331
      %vm333 = vcmp.ge.s32.totalorder %v136, %v331
      %vm334 = vcmp.ge.s32.totalorder %v137, %v331
      %vm335 = vcmp.ge.s32.totalorder %v138, %v331
      %vm336 = vcmp.ge.s32.totalorder %v139, %v331
      %vm337 = vcmp.ge.s32.totalorder %v140, %v331
      %vm338 = vcmp.ge.s32.totalorder %v141, %v331
      %vm339 = vcmp.ge.s32.totalorder %v142, %v331
      %v340 = vsel %vm332, 1, 0
      %v341 = vsel %vm333, 1, 0
      %v342 = vsel %vm334, 1, 0
      %v343 = vsel %vm335, 1, 0
      %v344 = vsel %vm336, 1, 0
      %v345 = vsel %vm337, 1, 0
      %v346 = vsel %vm338, 1, 0
      %v347 = vsel %vm339, 1, 0
      %vm348 = vcmp.eq.s32.totalorder %v340, 1
      %vm349 = vcmp.eq.s32.totalorder %v341, 1
      %vm350 = vcmp.eq.s32.totalorder %v342, 1
      %vm351 = vcmp.eq.s32.totalorder %v343, 1
      %vm352 = vcmp.eq.s32.totalorder %v344, 1
      %vm353 = vcmp.eq.s32.totalorder %v345, 1
      %vm354 = vcmp.eq.s32.totalorder %v346, 1
      %vm355 = vcmp.eq.s32.totalorder %v347, 1
      %v356 = vsel %vm348, %v323, 0.0
      %v357 = vsel %vm349, %v324, 0.0
      %v358 = vsel %vm350, %v325, 0.0
      %v359 = vsel %vm351, %v326, 0.0
      %v360 = vsel %vm352, %v327, 0.0
      %v361 = vsel %vm353, %v328, 0.0
      %v362 = vsel %vm354, %v329, 0.0
      %v363 = vsel %vm355, %v330, 0.0
      %s364 = scalar_lea.vmem %s132, 64
      %365 = vst [vmem:[%s364] sm:$0xff] %v356
      %366 = vst [vmem:[%s364 + $0x8] sm:$0xff] %v357
      %367 = vst [vmem:[%s364 + $0x10] sm:$0xff] %v358
      %368 = vst [vmem:[%s364 + $0x18] sm:$0xff] %v359
      %369 = vst [vmem:[%s364 + $0x20] sm:$0xff] %v360
      %370 = vst [vmem:[%s364 + $0x28] sm:$0xff] %v361
      %371 = vst [vmem:[%s364 + $0x30] sm:$0xff] %v362
      %372 = vst [vmem:[%s364 + $0x38] sm:$0xff] %v363
      %s373 = sadd.s32 %s143, 2
      %s374 = sld [smem:[#allocation3 + %s373]]
      %s375 = scalar_lea.vmem %s125, 128
      %v376 = vld [vmem:[%s375] sm:$0xff]
      %v377 = vld [vmem:[%s375 + $0x8] sm:$0xff]
      %v378 = vld [vmem:[%s375 + $0x10] sm:$0xff]
      %v379 = vld [vmem:[%s375 + $0x18] sm:$0xff]
      %v380 = vld [vmem:[%s375 + $0x20] sm:$0xff]
      %v381 = vld [vmem:[%s375 + $0x28] sm:$0xff]
      %v382 = vld [vmem:[%s375 + $0x30] sm:$0xff]
      %v383 = vld [vmem:[%s375 + $0x38] sm:$0xff]
      %s384 = sand.u32 %s374, 63
      %s385 = sand.u32 %s384, 7
      %s386 = sshrl.u32 %s384, 3
      %s387 = ssub.s32 8, %s385
      %v388 = vstv %s387
      %v389 = vrot.slane %v376, %v388
      %v390 = vstv %s387
      %v391 = vrot.slane %v377, %v390
      %v392 = vstv %s387
      %v393 = vrot.slane %v378, %v392
      %v394 = vstv %s387
      %v395 = vrot.slane %v379, %v394
      %v396 = vstv %s387
      %v397 = vrot.slane %v380, %v396
      %v398 = vstv %s387
      %v399 = vrot.slane %v381, %v398
      %v400 = vstv %s387
      %v401 = vrot.slane %v382, %v400
      %v402 = vstv %s387
      %v403 = vrot.slane %v383, %v402
      %v404 = vstv %s385
      %vm405 = vcmp.lt.s32.totalorder %v135, %v404
      %v406 = vsel %vm405, %v401, %v403
      %v407 = vsel %vm405, %v399, %v401
      %v408 = vsel %vm405, %v397, %v399
      %v409 = vsel %vm405, %v395, %v397
      %v410 = vsel %vm405, %v393, %v395
      %v411 = vsel %vm405, %v391, %v393
      %v412 = vsel %vm405, %v389, %v391
      %v413 = vsel %vm405, %v403, %v389
      %s414 = sand.u32 %s386, 1
      %v415 = vstv %s414
      %vm416 = vcmp.ne.s32.totalorder %v415, 0
      %v417 = vsel %vm416, %v406, %v413
      %v418 = vsel %vm416, %v413, %v412
      %v419 = vsel %vm416, %v412, %v411
      %v420 = vsel %vm416, %v411, %v410
      %v421 = vsel %vm416, %v410, %v409
      %v422 = vsel %vm416, %v409, %v408
      %v423 = vsel %vm416, %v408, %v407
      %v424 = vsel %vm416, %v407, %v406
      %s425 = sand.u32 %s386, 2
      %v426 = vstv %s425
      %vm427 = vcmp.ne.s32.totalorder %v426, 0
      %v428 = vsel %vm427, %v423, %v417
      %v429 = vsel %vm427, %v424, %v418
      %v430 = vsel %vm427, %v417, %v419
      %v431 = vsel %vm427, %v418, %v420
      %v432 = vsel %vm427, %v419, %v421
      %v433 = vsel %vm427, %v420, %v422
      %v434 = vsel %vm427, %v421, %v423
      %v435 = vsel %vm427, %v422, %v424
      %s436 = sand.u32 %s386, 4
      %v437 = vstv %s436
      %vm438 = vcmp.ne.s32.totalorder %v437, 0
      %v439 = vsel %vm438, %v432, %v428
      %v440 = vsel %vm438, %v433, %v429
      %v441 = vsel %vm438, %v434, %v430
      %v442 = vsel %vm438, %v435, %v431
      %v443 = vsel %vm438, %v428, %v432
      %v444 = vsel %vm438, %v429, %v433
      %v445 = vsel %vm438, %v430, %v434
      %v446 = vsel %vm438, %v431, %v435
      %v447 = vstv %s374
      %vm448 = vcmp.ge.s32.totalorder %v135, %v447
      %vm449 = vcmp.ge.s32.totalorder %v136, %v447
      %vm450 = vcmp.ge.s32.totalorder %v137, %v447
      %vm451 = vcmp.ge.s32.totalorder %v138, %v447
      %vm452 = vcmp.ge.s32.totalorder %v139, %v447
      %vm453 = vcmp.ge.s32.totalorder %v140, %v447
      %vm454 = vcmp.ge.s32.totalorder %v141, %v447
      %vm455 = vcmp.ge.s32.totalorder %v142, %v447
      %v456 = vsel %vm448, 1, 0
      %v457 = vsel %vm449, 1, 0
      %v458 = vsel %vm450, 1, 0
      %v459 = vsel %vm451, 1, 0
      %v460 = vsel %vm452, 1, 0
      %v461 = vsel %vm453, 1, 0
      %v462 = vsel %vm454, 1, 0
      %v463 = vsel %vm455, 1, 0
      %vm464 = vcmp.eq.s32.totalorder %v456, 1
      %vm465 = vcmp.eq.s32.totalorder %v457, 1
      %vm466 = vcmp.eq.s32.totalorder %v458, 1
      %vm467 = vcmp.eq.s32.totalorder %v459, 1
      %vm468 = vcmp.eq.s32.totalorder %v460, 1
      %vm469 = vcmp.eq.s32.totalorder %v461, 1
      %vm470 = vcmp.eq.s32.totalorder %v462, 1
      %vm471 = vcmp.eq.s32.totalorder %v463, 1
      %v472 = vsel %vm464, %v439, 0.0
      %v473 = vsel %vm465, %v440, 0.0
      %v474 = vsel %vm466, %v441, 0.0
      %v475 = vsel %vm467, %v442, 0.0
      %v476 = vsel %vm468, %v443, 0.0
      %v477 = vsel %vm469, %v444, 0.0
      %v478 = vsel %vm470, %v445, 0.0
      %v479 = vsel %vm471, %v446, 0.0
      %s480 = scalar_lea.vmem %s132, 128
      %481 = vst [vmem:[%s480] sm:$0xff] %v472
      %482 = vst [vmem:[%s480 + $0x8] sm:$0xff] %v473
      %483 = vst [vmem:[%s480 + $0x10] sm:$0xff] %v474
      %484 = vst [vmem:[%s480 + $0x18] sm:$0xff] %v475
      %485 = vst [vmem:[%s480 + $0x20] sm:$0xff] %v476
      %486 = vst [vmem:[%s480 + $0x28] sm:$0xff] %v477
      %487 = vst [vmem:[%s480 + $0x30] sm:$0xff] %v478
      %488 = vst [vmem:[%s480 + $0x38] sm:$0xff] %v479
      %s489 = sadd.s32 %s143, 3
      %s490 = sld [smem:[#allocation3 + %s489]]
      %s491 = scalar_lea.vmem %s125, 192
      %v492 = vld [vmem:[%s491] sm:$0xff]
      %v493 = vld [vmem:[%s491 + $0x8] sm:$0xff]
      %v494 = vld [vmem:[%s491 + $0x10] sm:$0xff]
      %v495 = vld [vmem:[%s491 + $0x18] sm:$0xff]
      %v496 = vld [vmem:[%s491 + $0x20] sm:$0xff]
      %v497 = vld [vmem:[%s491 + $0x28] sm:$0xff]
      %v498 = vld [vmem:[%s491 + $0x30] sm:$0xff]
      %v499 = vld [vmem:[%s491 + $0x38] sm:$0xff]
      %s500 = sand.u32 %s490, 63
      %s501 = sand.u32 %s500, 7
      %s502 = sshrl.u32 %s500, 3
      %s503 = ssub.s32 8, %s501
      %v504 = vstv %s503
      %v505 = vrot.slane %v492, %v504
      %v506 = vstv %s503
      %v507 = vrot.slane %v493, %v506
      %v508 = vstv %s503
      %v509 = vrot.slane %v494, %v508
      %v510 = vstv %s503
      %v511 = vrot.slane %v495, %v510
      %v512 = vstv %s503
      %v513 = vrot.slane %v496, %v512
      %v514 = vstv %s503
      %v515 = vrot.slane %v497, %v514
      %v516 = vstv %s503
      %v517 = vrot.slane %v498, %v516
      %v518 = vstv %s503
      %v519 = vrot.slane %v499, %v518
      %v520 = vstv %s501
      %vm521 = vcmp.lt.s32.totalorder %v135, %v520
      %v522 = vsel %vm521, %v517, %v519
      %v523 = vsel %vm521, %v515, %v517
      %v524 = vsel %vm521, %v513, %v515
      %v525 = vsel %vm521, %v511, %v513
      %v526 = vsel %vm521, %v509, %v511
      %v527 = vsel %vm521, %v507, %v509
      %v528 = vsel %vm521, %v505, %v507
      %v529 = vsel %vm521, %v519, %v505
      %s530 = sand.u32 %s502, 1
      %v531 = vstv %s530
      %vm532 = vcmp.ne.s32.totalorder %v531, 0
      %v533 = vsel %vm532, %v522, %v529
      %v534 = vsel %vm532, %v529, %v528
      %v535 = vsel %vm532, %v528, %v527
      %v536 = vsel %vm532, %v527, %v526
      %v537 = vsel %vm532, %v526, %v525
      %v538 = vsel %vm532, %v525, %v524
      %v539 = vsel %vm532, %v524, %v523
      %v540 = vsel %vm532, %v523, %v522
      %s541 = sand.u32 %s502, 2
      %v542 = vstv %s541
      %vm543 = vcmp.ne.s32.totalorder %v542, 0
      %v544 = vsel %vm543, %v539, %v533
      %v545 = vsel %vm543, %v540, %v534
      %v546 = vsel %vm543, %v533, %v535
      %v547 = vsel %vm543, %v534, %v536
      %v548 = vsel %vm543, %v535, %v537
      %v549 = vsel %vm543, %v536, %v538
      %v550 = vsel %vm543, %v537, %v539
      %v551 = vsel %vm543, %v538, %v540
      %s552 = sand.u32 %s502, 4
      %v553 = vstv %s552
      %vm554 = vcmp.ne.s32.totalorder %v553, 0
      %v555 = vsel %vm554, %v548, %v544
      %v556 = vsel %vm554, %v549, %v545
      %v557 = vsel %vm554, %v550, %v546
      %v558 = vsel %vm554, %v551, %v547
      %v559 = vsel %vm554, %v544, %v548
      %v560 = vsel %vm554, %v545, %v549
      %v561 = vsel %vm554, %v546, %v550
      %v562 = vsel %vm554, %v547, %v551
      %v563 = vstv %s490
      %vm564 = vcmp.ge.s32.totalorder %v135, %v563
      %vm565 = vcmp.ge.s32.totalorder %v136, %v563
      %vm566 = vcmp.ge.s32.totalorder %v137, %v563
      %vm567 = vcmp.ge.s32.totalorder %v138, %v563
      %vm568 = vcmp.ge.s32.totalorder %v139, %v563
      %vm569 = vcmp.ge.s32.totalorder %v140, %v563
      %vm570 = vcmp.ge.s32.totalorder %v141, %v563
      %vm571 = vcmp.ge.s32.totalorder %v142, %v563
      %v572 = vsel %vm564, 1, 0
      %v573 = vsel %vm565, 1, 0
      %v574 = vsel %vm566, 1, 0
      %v575 = vsel %vm567, 1, 0
      %v576 = vsel %vm568, 1, 0
      %v577 = vsel %vm569, 1, 0
      %v578 = vsel %vm570, 1, 0
      %v579 = vsel %vm571, 1, 0
      %vm580 = vcmp.eq.s32.totalorder %v572, 1
      %vm581 = vcmp.eq.s32.totalorder %v573, 1
      %vm582 = vcmp.eq.s32.totalorder %v574, 1
      %vm583 = vcmp.eq.s32.totalorder %v575, 1
      %vm584 = vcmp.eq.s32.totalorder %v576, 1
      %vm585 = vcmp.eq.s32.totalorder %v577, 1
      %vm586 = vcmp.eq.s32.totalorder %v578, 1
      %vm587 = vcmp.eq.s32.totalorder %v579, 1
      %v588 = vsel %vm580, %v555, 0.0
      %v589 = vsel %vm581, %v556, 0.0
      %v590 = vsel %vm582, %v557, 0.0
      %v591 = vsel %vm583, %v558, 0.0
      %v592 = vsel %vm584, %v559, 0.0
      %v593 = vsel %vm585, %v560, 0.0
      %v594 = vsel %vm586, %v561, 0.0
      %v595 = vsel %vm587, %v562, 0.0
      %s596 = scalar_lea.vmem %s132, 192
      %597 = vst [vmem:[%s596] sm:$0xff] %v588
      %598 = vst [vmem:[%s596 + $0x8] sm:$0xff] %v589
      %599 = vst [vmem:[%s596 + $0x10] sm:$0xff] %v590
      %600 = vst [vmem:[%s596 + $0x18] sm:$0xff] %v591
      %601 = vst [vmem:[%s596 + $0x20] sm:$0xff] %v592
      %602 = vst [vmem:[%s596 + $0x28] sm:$0xff] %v593
      %603 = vst [vmem:[%s596 + $0x30] sm:$0xff] %v594
      %604 = vst [vmem:[%s596 + $0x38] sm:$0xff] %v595
      %s605 = smul.u32 4, %s21
      %p606 = scmp.lt.s32.totalorder %s605, 7
      %s607 = scalar_select %p606, %s605, 7
      %s608 = smul.addr %s607, 8
      %s609 = smul.addr %s608, 8
      %s610 = scalar_lea.vmem %s2, %s609
      // Predicated region
      $region25: #{dirac_scheduler_forward.1} parent=23 // pred_check
        %p611 = pneg %p65
      $region26: #{dirac_scheduler_forward.1} parent=23 // pred_check_branch
        %613 = sbr.rel (%p611) target = $region28
      $region27: #{dirac_scheduler_forward.1} parent=23 // pred_region
        %s614 = smul.u32 4, %s21
      $region28: #{dirac_scheduler_forward.1} parent=23 // pred_fallthru
        _
    $region24: #{dirac_scheduler_forward.1} parent=5 // pred_fallthru
      _
    %p615 = scmp.le.s32.totalorder 2, %s16
    // Predicated region
    $region29: #{dirac_scheduler_forward.1} parent=5 // pred_check
      %p616 = pneg %p615
    $region30: #{dirac_scheduler_forward.1} parent=5 // pred_check_branch
      %618 = sbr.rel (%p616) target = $region32
    $region31: #{dirac_scheduler_forward.1} parent=5 // pred_region
      %s619 = ssub.s32 %s16, 2
      // Predicated region
      $region33: #{dirac_scheduler_forward.1} parent=31 // pred_check
        %p620 = pneg %p71
      $region34: #{dirac_scheduler_forward.1} parent=31 // pred_check_branch
        %622 = sbr.rel (%p620) target = $region36
      $region35: #{dirac_scheduler_forward.1} parent=31 // pred_region
        %s623 = smul.u32 4, %s22
        %p624 = scmp.lt.s32.totalorder %s623, 7
        %s625 = scalar_select %p624, %s623, 7
        %s626 = smul.addr %s625, 8
        %s627 = smul.addr %s626, 8
        %s628 = scalar_lea.vmem %s2, %s627
      $region36: #{dirac_scheduler_forward.1} parent=31 // pred_fallthru
        _
    $region32: #{dirac_scheduler_forward.1} parent=5 // pred_fallthru
      _
  $region6: #{dirac_scheduler_forward.1} parent=0 // loop_footer
    %s20 = sadd.s32 1, %s16
  $region7: #{dirac_scheduler_forward.1} parent=0 // loop_footer_branch
    %15 = sbr.rel target = $region3
  $region8: #{dirac_scheduler_forward.1} parent=0 // loop_exit
    _

</llo_original>
